<compile_context>
chip_gen: v7x
topology: tpu7x:2x2x1
jax: 0.10.0
libtpu: 0.0.40
codegen_flags: <defaults>
</compile_context>

<pallas_src>
import math

import jax
import jax.numpy as jnp
from jax.experimental import pallas as pl
from jax.experimental.pallas import tpu as pltpu

_NEG_SLOPE = 0.01  # PyTorch nn.LeakyReLU default


# ----------------------------------------------------------------------------- kernel
def _make_kernel(compute_dtype):
    def kernel(x_ref, w_ref, b_ref, o_ref, acc_ref):
        # x_ref: (tm, tk)  w_ref: (tk, tn)  b_ref: (1, tn)  o_ref: (tm, tn)
        k = pl.program_id(2)

        @pl.when(k == 0)
        def _init():
            acc_ref[...] = jnp.zeros_like(acc_ref)

        # Optional bf16 cast happens on the VMEM tile (no HBM penalty); f32 acc.
        x = x_ref[...].astype(compute_dtype)
        w = w_ref[...].astype(compute_dtype)
        acc_ref[...] += jnp.dot(x, w, preferred_element_type=jnp.float32)

        @pl.when(k == pl.num_programs(2) - 1)
        def _finish():
            y = acc_ref[...] + b_ref[...].astype(jnp.float32)
            # LeakyReLU: max(y, slope*y) == where(y>=0, y, slope*y) for slope in (0,1)
            o_ref[...] = jnp.maximum(y, _NEG_SLOPE * y).astype(o_ref.dtype)

    return kernel


# ----------------------------------------------------------------------------- helpers
def _round_up(n, m):
    return ((n + m - 1) // m) * m


def _largest_div_mult128(dim, cap):
    """Largest multiple-of-128 divisor of `dim` that is <= cap (None if none)."""
    best = None
    d = 128
    lim = min(dim, cap)
    while d <= lim:
        if dim % d == 0:
            best = d
        d += 128
    return best


def _vmem_budget():
    """(tile-selection budget, hard cap for vmem_limit_bytes), generation-aware."""
    try:
        cap = int(pltpu.get_tpu_info().vmem_capacity_bytes)
    except Exception:
        cap = 64 << 20  # v7x per-TC physical size: safe lower bound everywhere
    budget = int(cap * 0.70)       # headroom for Mosaic internal scratch
    limit_cap = int(cap * 0.875)   # never request more than physical VMEM
    return budget, limit_cap


def bf16_weight(w_t):
    """Cast the (in_dim, out_dim) weight ONCE at parameter-load time and cache it;
    this (not a per-call wrapper cast) is what halves the per-call W read traffic."""
    return w_t.astype(jnp.bfloat16)


# ----------------------------------------------------------------------------- wrapper
def embedding_forward(x, w_t, b, *, use_bf16_matmul=False, out_dtype=None,
                      tm=None, tn=None, tk=None):
    """leaky_relu(x @ w_t + b).

    x   : (B, in_dim)
    w_t : (in_dim, out_dim)   transposed PyTorch weight (pre-cast to bf16 if desired)
    b   : (out_dim,)
    use_bf16_matmul : feed bf16 to the MXU (cast happens in-kernel; f32 accumulation)
    out_dtype       : output dtype (defaults to x.dtype)
    """
    B, in_dim = x.shape
    k_dim, out_dim = w_t.shape
    assert k_dim == in_dim, "w_t must be (in_dim, out_dim)"
    out_dtype = x.dtype if out_dtype is None else out_dtype

    if use_bf16_matmul:
        compute_dtype = jnp.bfloat16
    elif x.dtype == w_t.dtype:
        compute_dtype = x.dtype
    else:
        compute_dtype = jnp.float32

    xb = jnp.dtype(x.dtype).itemsize
    wb = jnp.dtype(w_t.dtype).itemsize
    bb = jnp.dtype(b.dtype).itemsize
    ob = jnp.dtype(out_dtype).itemsize

    b2 = b.reshape(1, out_dim)

    budget, limit_cap = _vmem_budget()
    sub = 16 if x.dtype == jnp.bfloat16 else 8  # sublane packing of the HBM x tile

    def step_bytes(tm_, tn_, tk_):
        # Conservative: every pipelined operand double-buffered + f32 acc scratch.
        return (2 * tm_ * tk_ * xb
                + 2 * tk_ * tn_ * wb
                + 2 * tn_ * bb
                + 2 * tm_ * tn_ * ob
                + tm_ * tn_ * 4)

    # --- tile selection -------------------------------------------------------
    if tn is None:
        tn = out_dim if out_dim <= 1024 else 1024            # lane-dense N tile
    if tk is None:
        if in_dim <= 1024:
            tk = in_dim
        else:
            tk = _largest_div_mult128(in_dim, 1024) or in_dim  # must divide in_dim
    if tm is None:
        if B <= 128:
            tm = B                                            # single M block, full dim
        else:
            # >= 4 M tiles: both v7x TensorCores get work and DMAs overlap compute
            tm = min(512, _round_up((B + 3) // 4, sub))

    # Shrink until the per-step footprint fits the generation-aware VMEM budget.
    while step_bytes(tm, tn, tk) > budget:
        if tn > 128:
            tn = max(128, ((tn // 2) // 128) * 128)
            continue
        smaller_k = _largest_div_mult128(in_dim, max(128, tk // 2))
        if smaller_k is not None and smaller_k < tk:
            tk = smaller_k
            continue
        if tm > sub:
            tm = max(sub, ((tm // 2) // sub) * sub)
            continue
        break  # cannot shrink further; Mosaic will report if it truly cannot fit

    grid = (pl.cdiv(B, tm), pl.cdiv(out_dim, tn), in_dim // tk)

    cost = pl.CostEstimate(
        flops=2 * B * in_dim * out_dim,
        transcendentals=0,
        bytes_accessed=(B * in_dim * xb + in_dim * out_dim * wb
                        + out_dim * bb + B * out_dim * ob),
    )

    vmem_limit = int(min(limit_cap,
                         max(step_bytes(tm, tn, tk) + (4 << 20), 16 << 20)))

    return pl.pallas_call(
        _make_kernel(compute_dtype),
        out_shape=jax.ShapeDtypeStruct((B, out_dim), out_dtype),
        grid_spec=pltpu.PrefetchScalarGridSpec(
            num_scalar_prefetch=0,
            grid=grid,
            in_specs=[
                pl.BlockSpec((tm, tk), lambda i, j, k: (i, k)),   # x row/K tile
                pl.BlockSpec((tk, tn), lambda i, j, k: (k, j)),   # weight K/N tile
                pl.BlockSpec((1, tn), lambda i, j, k: (0, j)),    # bias N tile
            ],
            out_specs=pl.BlockSpec((tm, tn), lambda i, j, k: (i, j)),
            scratch_shapes=[pltpu.VMEM((tm, tn), jnp.float32)],   # f32 accumulator
        ),
        compiler_params=pltpu.CompilerParams(
            dimension_semantics=("parallel", "parallel", "arbitrary"),
            vmem_limit_bytes=vmem_limit,
        ),
        cost_estimate=cost,
    )(x, w_t, b2)


# ----------------------------------------------------------------------------- init/ref
def init_params(key, input_dim, output_dim):
    """Mirror the PyTorch module's init deterministically.

    - weight: xavier_uniform_ with gain = calculate_gain('leaky_relu')
              = sqrt(2 / (1 + 0.01**2))
    - bias:   nn.Linear default uniform(-1/sqrt(fan_in), 1/sqrt(fan_in))
    (For best store-path perf, choose output_dim as a multiple of 128 when the
     model allows it — lane-dense output slabs avoid masked vst.msk stores.)
    """
    kw, kb = jax.random.split(key)
    gain = math.sqrt(2.0 / (1.0 + _NEG_SLOPE ** 2))
    bound_w = gain * math.sqrt(6.0 / (input_dim + output_dim))
    w = jax.random.uniform(
        kw, (output_dim, input_dim), jnp.float32, minval=-bound_w, maxval=bound_w
    )
    bound_b = 1.0 / math.sqrt(input_dim)
    b = jax.random.uniform(
        kb, (output_dim,), jnp.float32, minval=-bound_b, maxval=bound_b
    )
    return w, b


def _reference(x, w, b):
    y = x @ w.T + b
    return jnp.where(y >= 0, y, _NEG_SLOPE * y)


# ----------------------------------------------------------------------------- main
if __name__ == "__main__":
    key = jax.random.PRNGKey(0)
    k_x, k_x2, k_p = jax.random.split(key, 3)

    batch, input_dim, output_dim = 64, 32, 128
    x = jax.random.normal(k_x, (batch, input_dim), jnp.float32)
    w, b = init_params(k_p, input_dim, output_dim)   # w: (output_dim, input_dim)
    w_t = w.T                                        # transposed once at load time
    ref = _reference(x, w, b)

    # 1) f32 path — exact semantics of the PyTorch module.
    out = jax.block_until_ready(embedding_forward(x, w_t, b))
    assert out.shape == (batch, output_dim)
    assert jnp.allclose(out, ref, atol=1e-5, rtol=1e-5)

    # 2) Ragged batch — masked partial-block stores, no pad/slice HBM round trip.
    x_odd = jax.random.normal(k_x2, (50, input_dim), jnp.float32)
    out_odd = jax.block_until_ready(embedding_forward(x_odd, w_t, b))
    assert out_odd.shape == (50, output_dim)
    assert jnp.allclose(out_odd, _reference(x_odd, w, b), atol=1e-5, rtol=1e-5)

    # 3) bf16-MXU path — weight pre-cast once (cached outside), x cast in-kernel.
    w_t_bf16 = bf16_weight(w_t)
    out_bf16 = jax.block_until_ready(
        embedding_forward(x, w_t_bf16, b, use_bf16_matmul=True))
    assert jnp.allclose(out_bf16, ref, atol=5e-2, rtol=5e-2)

    print("KERNEL_OK")
</pallas_src>

<mosaic_0001>
module attributes {stable_mosaic.version = 11 : i64} {
  func.func @kernel(%arg0: i32, %arg1: i32, %arg2: i32, %arg3: memref<64x32xf32, #tpu.memory_space<vmem>>, %arg4: memref<32x128xf32, #tpu.memory_space<vmem>>, %arg5: memref<1x128xf32, #tpu.memory_space<vmem>>, %arg6: memref<64x128xf32, #tpu.memory_space<vmem>>, %arg7: memref<64x128xf32, #tpu.memory_space<vmem>>) attributes {dimension_semantics = [#tpu.dimension_semantics<parallel>, #tpu.dimension_semantics<parallel>, #tpu.dimension_semantics<arbitrary>], iteration_bounds = array<i64: 1, 1, 1>, scalar_prefetch = 0 : i64, scratch_operands = 1 : i64, tpu.core_type = #tpu.core_type<tc>, window_params = [{transform_indices = @transform_0, window_bounds = array<i64: 64, 32>}, {transform_indices = @transform_1, window_bounds = array<i64: 32, 128>}, {transform_indices = @transform_2, window_bounds = array<i64: 1, 128>}, {transform_indices = @transform_3, window_bounds = array<i64: 64, 128>}]} {
    %c0_i32 = arith.constant 0 : i32
    %0 = arith.cmpi eq, %arg2, %c0_i32 : i32
    %1 = arith.extui %0 : i1 to i32
    %c0_i32_0 = arith.constant 0 : i32
    %2 = arith.cmpi ne, %1, %c0_i32_0 : i32
    scf.if %2 {
      %cst_10 = arith.constant 0.000000e+00 : f32
      %12 = vector.broadcast %cst_10 : f32 to vector<64x128xf32>
      %c0_11 = arith.constant 0 : index
      %c0_12 = arith.constant 0 : index
      %13 = vector.load %arg7[%c0_11, %c0_12] : memref<64x128xf32, #tpu.memory_space<vmem>>, vector<64x128xf32>
      tpu.vector_store %arg7[%c0_11, %c0_12], %12 {strides = array<i32>} : memref<64x128xf32, #tpu.memory_space<vmem>>, vector<64x128xf32>,
    } else {
    }
    %c0 = arith.constant 0 : index
    %c0_1 = arith.constant 0 : index
    %3 = vector.load %arg3[%c0, %c0_1] : memref<64x32xf32, #tpu.memory_space<vmem>>, vector<64x32xf32>
    %c0_2 = arith.constant 0 : index
    %c0_3 = arith.constant 0 : index
    %4 = vector.load %arg4[%c0_2, %c0_3] : memref<32x128xf32, #tpu.memory_space<vmem>>, vector<32x128xf32>
    %c0_4 = arith.constant 0 : index
    %c0_5 = arith.constant 0 : index
    %5 = vector.load %arg7[%c0_4, %c0_5] : memref<64x128xf32, #tpu.memory_space<vmem>>, vector<64x128xf32>
    %cst = arith.constant dense<0.000000e+00> : vector<64x128xf32>
    %6 = tpu.matmul %3, %4, %cst {dimension_numbers = #tpu.dot_dimension_numbers<[1], [0], [0], [1], [0, 0, 1, 1], [], []>} : vector<64x32xf32>, vector<32x128xf32>, vector<64x128xf32> -> vector<64x128xf32>
    %7 = arith.addf %5, %6 : vector<64x128xf32>
    %c0_6 = arith.constant 0 : index
    %c0_7 = arith.constant 0 : index
    %8 = vector.load %arg7[%c0_6, %c0_7] : memref<64x128xf32, #tpu.memory_space<vmem>>, vector<64x128xf32>
    tpu.vector_store %arg7[%c0_6, %c0_7], %7 {strides = array<i32>} : memref<64x128xf32, #tpu.memory_space<vmem>>, vector<64x128xf32>,
    %c0_i32_8 = arith.constant 0 : i32
    %9 = arith.cmpi eq, %arg2, %c0_i32_8 : i32
    %10 = arith.extui %9 : i1 to i32
    %c0_i32_9 = arith.constant 0 : i32
    %11 = arith.cmpi ne, %10, %c0_i32_9 : i32
    scf.if %11 {
      %c0_10 = arith.constant 0 : index
      %c0_11 = arith.constant 0 : index
      %12 = vector.load %arg7[%c0_10, %c0_11] : memref<64x128xf32, #tpu.memory_space<vmem>>, vector<64x128xf32>
      %c0_12 = arith.constant 0 : index
      %c0_13 = arith.constant 0 : index
      %13 = vector.load %arg5[%c0_12, %c0_13] : memref<1x128xf32, #tpu.memory_space<vmem>>, vector<1x128xf32>
      %14 = vector.broadcast %13 : vector<1x128xf32> to vector<64x128xf32>
      %15 = arith.addf %12, %14 : vector<64x128xf32>
      %cst_14 = arith.constant 0.00999999977 : f32
      %16 = vector.broadcast %cst_14 : f32 to vector<64x128xf32>
      %17 = arith.mulf %16, %15 : vector<64x128xf32>
      %18 = arith.maximumf %15, %17 : vector<64x128xf32>
      %c0_15 = arith.constant 0 : index
      %c0_16 = arith.constant 0 : index
      %19 = vector.load %arg6[%c0_15, %c0_16] : memref<64x128xf32, #tpu.memory_space<vmem>>, vector<64x128xf32>
      tpu.vector_store %arg6[%c0_15, %c0_16], %18 {strides = array<i32>} : memref<64x128xf32, #tpu.memory_space<vmem>>, vector<64x128xf32>,
    } else {
    }
    return
  }
  func.func @transform_0(%arg0: i32, %arg1: i32, %arg2: i32) -> (i32, i32) {
    %c0_i32 = arith.constant 0 : i32
    return %arg0, %arg2 : i32, i32
  }
  func.func @transform_1(%arg0: i32, %arg1: i32, %arg2: i32) -> (i32, i32) {
    %c0_i32 = arith.constant 0 : i32
    return %arg2, %arg1 : i32, i32
  }
  func.func @transform_2(%arg0: i32, %arg1: i32, %arg2: i32) -> (i32, i32) {
    %c0_i32 = arith.constant 0 : i32
    %c0_i32_0 = arith.constant 0 : i32
    return %c0_i32, %arg1 : i32, i32
  }
  func.func @transform_3(%arg0: i32, %arg1: i32, %arg2: i32) -> (i32, i32) {
    %c0_i32 = arith.constant 0 : i32
    return %arg0, %arg1 : i32, i32
  }
}

</mosaic_0001>

<llo_original>
// kernel: tpu_custom_call.1
$region0: #{tpu_custom_call.1}
  #allocation0 [shape = 'u32[]', space=smem, size = 0x4, offset = 0x4, fixed_abs, tag = 'smem constant byte address 0x4 - core index']
  #allocation1 [shape = 'u32[144,128]{1,0:T(1,128)}', space=vmem, size = 0x12000, scoped, tag = 'internal scratch']
  #allocation2 [shape = 'f32[64,128]{1,0:T(8,128)}', space=vmem, size = 0x8000, scoped, tag = 'scratch operand']
  %s0 = inlined_call_operand.vmem [shape: f32[64,32], index: 0, kind: input, shape index: {}]
  %s1 = inlined_call_operand.vmem [shape: f32[32,128], index: 1, kind: input, shape index: {}]
  %s2 = inlined_call_operand.vmem [shape: f32[1,128], index: 2, kind: input, shape index: {}]
  %s3 = inlined_call_operand.hbm [shape: f32[64,128], index: 3, kind: output, shape index: {}]
  %s4 = sld [smem:[#allocation0]]
  $region30: #{tpu_custom_call.1} parent=0
    _
  %s6 = ssub.s32 1, %s4
  %s7 = scalar_select 0, %s6, %s4
  $region1: #{tpu_custom_call.1} parent=0
    #allocation3 [shape = 'u8[32768]{0}', space=vmem, size = 0x8000, scoped, tag = 'output window, operand 0, single buffered']
    #allocation4 [shape = 's32[1]{0}', space=sflag, size = 0x4, scoped, tag = 'scoped memory for tpu_custom_call.1']
    %8 = vsyncpa [#allocation4], 0
    // Predicated region
    $region2: #{tpu_custom_call.1} parent=1 // pred_check
      _
    $region3: #{tpu_custom_call.1} parent=1 // pred_check_branch
      %10 = sbr.rel (0) target = $region5
    $region4: #{tpu_custom_call.1} parent=1 // pred_region
      _
    $region5: #{tpu_custom_call.1} parent=1 // pred_fallthru
      _
    // Predicated region
    $region6: #{tpu_custom_call.1} parent=1 // pred_check
      _
    $region7: #{tpu_custom_call.1} parent=1 // pred_check_branch
      %12 = sbr.rel (0) target = $region9
    $region8: #{tpu_custom_call.1} parent=1 // pred_region
      _
    $region9: #{tpu_custom_call.1} parent=1 // pred_fallthru
      _
    // Predicated region
    $region10: #{tpu_custom_call.1} parent=1 // pred_check
      _
    $region11: #{tpu_custom_call.1} parent=1 // pred_check_branch
      %14 = sbr.rel (0) target = $region13
    $region12: #{tpu_custom_call.1} parent=1 // pred_region
      _
    $region13: #{tpu_custom_call.1} parent=1 // pred_fallthru
      _
    %p15 = scmp.eq.s32.totalorder 0, 0
    // Predicated region
    $region14: #{tpu_custom_call.1} parent=1 // pred_check
      %p16 = pneg %p15
    $region15: #{tpu_custom_call.1} parent=1 // pred_check_branch
      %18 = sbr.rel (%p16) target = $region17
    $region16: #{tpu_custom_call.1} parent=1 // pred_region
      %19 = vst [vmem:[#allocation2] sm:$0xff] 0.0
      %20 = vst [vmem:[#allocation2 + $0x8] sm:$0xff] 0.0
      %21 = vst [vmem:[#allocation2 + $0x10] sm:$0xff] 0.0
      %22 = vst [vmem:[#allocation2 + $0x18] sm:$0xff] 0.0
      %23 = vst [vmem:[#allocation2 + $0x20] sm:$0xff] 0.0
      %24 = vst [vmem:[#allocation2 + $0x28] sm:$0xff] 0.0
      %25 = vst [vmem:[#allocation2 + $0x30] sm:$0xff] 0.0
      %26 = vst [vmem:[#allocation2 + $0x38] sm:$0xff] 0.0
    $region17: #{tpu_custom_call.1} parent=1 // pred_fallthru
      _
    %v27 = vld [vmem:[%s0] sm:$0xff]
    %v28 = vld [vmem:[%s0 + $0x8] sm:$0xff]
    %v29 = vld [vmem:[%s0 + $0x10] sm:$0xff]
    %v30 = vld [vmem:[%s0 + $0x18] sm:$0xff]
    %v31 = vld [vmem:[%s0 + $0x20] sm:$0xff]
    %v32 = vld [vmem:[%s0 + $0x28] sm:$0xff]
    %v33 = vld [vmem:[%s0 + $0x30] sm:$0xff]
    %v34 = vld [vmem:[%s0 + $0x38] sm:$0xff]
    %v35 = vld [vmem:[%s1] sm:$0xff]
    %v36 = vld [vmem:[%s1 + $0x8] sm:$0xff]
    %v37 = vld [vmem:[%s1 + $0x10] sm:$0xff]
    %v38 = vld [vmem:[%s1 + $0x18] sm:$0xff]
    %v39 = vld [vmem:[#allocation2] sm:$0xff]
    %v40 = vld [vmem:[#allocation2 + $0x8] sm:$0xff]
    %v41 = vld [vmem:[#allocation2 + $0x10] sm:$0xff]
    %v42 = vld [vmem:[#allocation2 + $0x18] sm:$0xff]
    %v43 = vld [vmem:[#allocation2 + $0x20] sm:$0xff]
    %v44 = vld [vmem:[#allocation2 + $0x28] sm:$0xff]
    %v45 = vld [vmem:[#allocation2 + $0x30] sm:$0xff]
    %v46 = vld [vmem:[#allocation2 + $0x38] sm:$0xff]
    %vm47 = vcmask 261120
    %v49 = vsel %vm47, %v27, 0
    %v52 = vsel %vm47, %v28, 0
    %v55 = vsel %vm47, %v29, 0
    %v58 = vsel %vm47, %v30, 0
    %v61 = vsel %vm47, %v31, 0
    %v64 = vsel %vm47, %v32, 0
    %v67 = vsel %vm47, %v33, 0
    %v70 = vsel %vm47, %v34, 0
    %72 = vmatprep.subr.mxu0 0.0
    %73 = vmatpush1.msra.mxu0 %v35
    %74 = vmatprep.subr.mxu0 0.0
    %75 = vmatpush1.msra.mxu0 %v36
    %76 = vmatprep.subr.mxu0 0.0
    %77 = vmatpush1.msra.mxu0 %v37
    %78 = vmatprep.subr.mxu0 0.0
    %79 = vmatpush1.msra.mxu0 %v38
    %80 = vmatprep.subr.mxu0 0.0
    %81 = vmatpush1.msra.mxu0 0.0
    %82 = vmatprep.subr.mxu0 0.0
    %83 = vmatpush1.msra.mxu0 0.0
    %84 = vmatprep.subr.mxu0 0.0
    %85 = vmatpush1.msra.mxu0 0.0
    %86 = vmatprep.subr.mxu0 0.0
    %87 = vmatpush1.msra.mxu0 0.0
    %88 = vmatprep.subr.mxu0 0.0
    %89 = vmatpush1.msra.mxu0 0.0
    %90 = vmatprep.subr.mxu0 0.0
    %91 = vmatpush1.msra.mxu0 0.0
    %92 = vmatprep.subr.mxu0 0.0
    %93 = vmatpush1.msra.mxu0 0.0
    %94 = vmatprep.subr.mxu0 0.0
    %95 = vmatpush1.msra.mxu0 0.0
    %96 = vmatprep.subr.mxu0 0.0
    %97 = vmatpush1.msra.mxu0 0.0
    %98 = vmatprep.subr.mxu0 0.0
    %99 = vmatpush1.msra.mxu0 0.0
    %100 = vmatprep.subr.mxu0 0.0
    %101 = vmatpush1.msra.mxu0 0.0
    %102 = vmatprep.subr.mxu0 0.0
    %103 = vmatpush1.msra.mxu0 0.0
    %104 = vmatprep.subr.mxu0 0.0
    %105 = vmatpush1.msra.mxu0 0.0
    %106 = vmatprep.subr.mxu0 0.0
    %107 = vmatpush1.msra.mxu0 0.0
    %108 = vmatprep.subr.mxu0 0.0
    %109 = vmatpush1.msra.mxu0 0.0
    %110 = vmatprep.subr.mxu0 0.0
    %111 = vmatpush1.msra.mxu0 0.0
    %112 = vmatprep.subr.mxu0 0.0
    %113 = vmatpush1.msra.mxu0 0.0
    %114 = vmatprep.subr.mxu0 0.0
    %115 = vmatpush1.msra.mxu0 0.0
    %116 = vmatprep.subr.mxu0 0.0
    %117 = vmatpush1.msra.mxu0 0.0
    %118 = vmatprep.subr.mxu0 0.0
    %119 = vmatpush1.msra.mxu0 0.0
    %120 = vmatprep.subr.mxu0 0.0
    %121 = vmatpush1.msra.mxu0 0.0
    %122 = vmatprep.subr.mxu0 0.0
    %123 = vmatpush1.msra.mxu0 0.0
    %124 = vmatprep.subr.mxu0 0.0
    %125 = vmatpush1.msra.mxu0 0.0
    %126 = vmatprep.subr.mxu0 0.0
    %127 = vmatpush1.msra.mxu0 0.0
    %128 = vmatprep.subr.mxu0 0.0
    %129 = vmatpush1.msra.mxu0 0.0
    %130 = vmatprep.subr.mxu0 0.0
    %131 = vmatpush1.msra.mxu0 0.0
    %132 = vmatprep.subr.mxu0 0.0
    %133 = vmatpush1.msra.mxu0 0.0
    %134 = vmatprep.subr.mxu0 0.0
    %135 = vmatpush1.msra.mxu0 0.0
    %136 = vmatprep.mubr.f32.mxu0 0.0
    %137 = vmatmul.mubr.f32.gmra.mrb[0].mxu0 %v49
    %v138 = vpop.f32.mrb[0].mxu0
    %v139 = vadd.f32 0.0, %v138
    %v140 = vpop.f32.mrb[0].mxu0
    %141 = vmatprep.mubr.f32.mxu0 0.0
    %142 = vmatmul.mubr.f32.gmra.mrb[0].mxu0 %v52
    %v143 = vpop.f32.mrb[0].mxu0
    %v144 = vadd.f32 0.0, %v143
    %v145 = vpop.f32.mrb[0].mxu0
    %146 = vmatprep.mubr.f32.mxu0 0.0
    %147 = vmatmul.mubr.f32.gmra.mrb[0].mxu0 %v55
    %v148 = vpop.f32.mrb[0].mxu0
    %v149 = vadd.f32 0.0, %v148
    %v150 = vpop.f32.mrb[0].mxu0
    %151 = vmatprep.mubr.f32.mxu0 0.0
    %152 = vmatmul.mubr.f32.gmra.mrb[0].mxu0 %v58
    %v153 = vpop.f32.mrb[0].mxu0
    %v154 = vadd.f32 0.0, %v153
    %v155 = vpop.f32.mrb[0].mxu0
    %156 = vmatprep.mubr.f32.mxu0 0.0
    %157 = vmatmul.mubr.f32.gmra.mrb[0].mxu0 %v61
    %v158 = vpop.f32.mrb[0].mxu0
    %v159 = vadd.f32 0.0, %v158
    %v160 = vpop.f32.mrb[0].mxu0
    %161 = vmatprep.mubr.f32.mxu0 0.0
    %162 = vmatmul.mubr.f32.gmra.mrb[0].mxu0 %v64
    %v163 = vpop.f32.mrb[0].mxu0
    %v164 = vadd.f32 0.0, %v163
    %v165 = vpop.f32.mrb[0].mxu0
    %166 = vmatprep.mubr.f32.mxu0 0.0
    %167 = vmatmul.mubr.f32.gmra.mrb[0].mxu0 %v67
    %v168 = vpop.f32.mrb[0].mxu0
    %v169 = vadd.f32 0.0, %v168
    %v170 = vpop.f32.mrb[0].mxu0
    %171 = vmatprep.mubr.f32.mxu0 0.0
    %172 = vmatmul.mubr.f32.gmra.mrb[0].mxu0 %v70
    %v173 = vpop.f32.mrb[0].mxu0
    %v174 = vadd.f32 0.0, %v173
    %v175 = vpop.f32.mrb[0].mxu0
    %176 = vdwg.mxu0
    %v177 = vadd.f32 %v39, %v139
    %v178 = vadd.f32 %v40, %v144
    %v179 = vadd.f32 %v41, %v149
    %v180 = vadd.f32 %v42, %v154
    %v181 = vadd.f32 %v43, %v159
    %v182 = vadd.f32 %v44, %v164
    %v183 = vadd.f32 %v45, %v169
    %v184 = vadd.f32 %v46, %v174
    %185 = vst [vmem:[#allocation2] sm:$0xff] %v177
    %186 = vst [vmem:[#allocation2 + $0x8] sm:$0xff] %v178
    %187 = vst [vmem:[#allocation2 + $0x10] sm:$0xff] %v179
    %188 = vst [vmem:[#allocation2 + $0x18] sm:$0xff] %v180
    %189 = vst [vmem:[#allocation2 + $0x20] sm:$0xff] %v181
    %190 = vst [vmem:[#allocation2 + $0x28] sm:$0xff] %v182
    %191 = vst [vmem:[#allocation2 + $0x30] sm:$0xff] %v183
    %192 = vst [vmem:[#allocation2 + $0x38] sm:$0xff] %v184
    // Predicated region
    $region18: #{tpu_custom_call.1} parent=1 // pred_check
      %p193 = pneg %p15
    $region19: #{tpu_custom_call.1} parent=1 // pred_check_branch
      %195 = sbr.rel (%p193) target = $region21
    $region20: #{tpu_custom_call.1} parent=1 // pred_region
      %v196 = vld [vmem:[#allocation2] sm:$0xff]
      %v197 = vld [vmem:[#allocation2 + $0x8] sm:$0xff]
      %v198 = vld [vmem:[#allocation2 + $0x10] sm:$0xff]
      %v199 = vld [vmem:[#allocation2 + $0x18] sm:$0xff]
      %v200 = vld [vmem:[#allocation2 + $0x20] sm:$0xff]
      %v201 = vld [vmem:[#allocation2 + $0x28] sm:$0xff]
      %v202 = vld [vmem:[#allocation2 + $0x30] sm:$0xff]
      %v203 = vld [vmem:[#allocation2 + $0x38] sm:$0xff]
      %v204 = vld [vmem:[%s2] sm:$0x1]
      %v206 = vlaneseq
      %v207 = vshrl.u32 %v206, 7
      %v208 = vsub.s32 0, %v207
      %v209 = vrot.slane %v204, %v208
      %v211 = vadd.f32 %v196, %v209
      %v212 = vadd.f32 %v197, %v209
      %v213 = vadd.f32 %v198, %v209
      %v214 = vadd.f32 %v199, %v209
      %v215 = vadd.f32 %v200, %v209
      %v216 = vadd.f32 %v201, %v209
      %v217 = vadd.f32 %v202, %v209
      %v218 = vadd.f32 %v203, %v209
      %v219 = vmul.f32 %v211, 0.01
      %v220 = vmul.f32 %v212, 0.01
      %v221 = vmul.f32 %v213, 0.01
      %v222 = vmul.f32 %v214, 0.01
      %v223 = vmul.f32 %v215, 0.01
      %v224 = vmul.f32 %v216, 0.01
      %v225 = vmul.f32 %v217, 0.01
      %v226 = vmul.f32 %v218, 0.01
      %v227 = vmax.f32 %v211, %v219
      %v228 = vmax.f32 %v212, %v220
      %v229 = vmax.f32 %v213, %v221
      %v230 = vmax.f32 %v214, %v222
      %v231 = vmax.f32 %v215, %v223
      %v232 = vmax.f32 %v216, %v224
      %v233 = vmax.f32 %v217, %v225
      %v234 = vmax.f32 %v218, %v226
      %235 = vst [vmem:[#allocation3] sm:$0xff] %v227
      %236 = vst [vmem:[#allocation3 + $0x8] sm:$0xff] %v228
      %237 = vst [vmem:[#allocation3 + $0x10] sm:$0xff] %v229
      %238 = vst [vmem:[#allocation3 + $0x18] sm:$0xff] %v230
      %239 = vst [vmem:[#allocation3 + $0x20] sm:$0xff] %v231
      %240 = vst [vmem:[#allocation3 + $0x28] sm:$0xff] %v232
      %241 = vst [vmem:[#allocation3 + $0x30] sm:$0xff] %v233
      %242 = vst [vmem:[#allocation3 + $0x38] sm:$0xff] %v234
    $region21: #{tpu_custom_call.1} parent=1 // pred_fallthru
      _
    // Predicated region
    $region22: #{tpu_custom_call.1} parent=1 // pred_check
      _
    $region23: #{tpu_custom_call.1} parent=1 // pred_check_branch
      %244 = sbr.rel (0) target = $region25
    $region24: #{tpu_custom_call.1} parent=1 // pred_region
      %s246 = ssub.s32 1024, 1024
      %247 = vsyncadd [#allocation4], %s246
      %s248 = sshll.u32 [#allocation3], 4
      %s249 = int_to_ptr.vmem [resolvable:$true] %s248
      %254 = dma.vmem_to_hbm [thread:$0]  %s249, 1024, %s3, [#allocation4], 128, 128, 8
    $region25: #{tpu_custom_call.1} parent=1 // pred_fallthru
      _
    // Predicated region
    $region26: #{tpu_custom_call.1} parent=1 // pred_check
      _
    $region27: #{tpu_custom_call.1} parent=1 // pred_check_branch
      %256 = sbr.rel (0) target = $region29
    $region28: #{tpu_custom_call.1} parent=1 // pred_region
      %257 = dma.done [#allocation4], 1024
    $region29: #{tpu_custom_call.1} parent=1 // pred_fallthru
      _
    %258 = vsyncpa [#allocation4], 1

</llo_original>
